<compile_context>
chip_gen: v6e
topology: v6e:2x2x1
jax: 0.10.0
libtpu: 0.0.40
codegen_flags: <defaults>
</compile_context>

<pallas_src>
import math

import jax
import jax.numpy as jnp
from jax.experimental import pallas as pl
from jax.experimental.pallas import tpu as pltpu

LN_EPS = 1e-5


# ----------------------------------------------------------------------------
# math helpers (shared by kernel and references)
# ----------------------------------------------------------------------------
def _layernorm(h, gamma, beta):
    mean = jnp.mean(h, axis=-1, keepdims=True)
    ctr = h - mean
    var = jnp.mean(ctr * ctr, axis=-1, keepdims=True)
    inv = jax.lax.rsqrt(var + LN_EPS)
    return ctr * inv * gamma + beta


def _gelu_exact(x):
    # nn.GELU() default = exact erf formulation (kept for semantics parity).
    return 0.5 * x * (1.0 + jax.lax.erf(x * (1.0 / math.sqrt(2.0))))


# ----------------------------------------------------------------------------
# kernel
# ----------------------------------------------------------------------------
def projection_head_kernel(
    x_ref,    # (TB, Din)   f32 batch tile
    w1_ref,   # (Din, H)    f32, VMEM-resident
    p1_ref,   # (3, H)      rows: [bias1, ln1_weight, ln1_bias]
    w2_ref,   # (H, Dout)   f32, VMEM-resident
    p2_ref,   # (3, Dout)   rows: [bias2, ln2_weight, ln2_bias]
    o_ref,    # (TB, Dout)
):
    x = x_ref[...].astype(jnp.bfloat16)
    w1 = w1_ref[...].astype(jnp.bfloat16)
    w2 = w2_ref[...].astype(jnp.bfloat16)

    b1, g1, be1 = p1_ref[0:1, :], p1_ref[1:2, :], p1_ref[2:3, :]
    b2, g2, be2 = p2_ref[0:1, :], p2_ref[1:2, :], p2_ref[2:3, :]

    # Linear 1 (bf16 MXU, f32 accumulate) + LayerNorm 1 + exact GELU
    h = jnp.dot(x, w1, preferred_element_type=jnp.float32) + b1
    h = _layernorm(h, g1, be1)
    h = _gelu_exact(h)
    # TODO(synk): Dropout(0.1) is identity here (inference); a training path would
    # need pltpu.prng_seed / pltpu.prng_random_bits masking.

    # Linear 2 + LayerNorm 2
    y = jnp.dot(h.astype(jnp.bfloat16), w2, preferred_element_type=jnp.float32) + b2
    y = _layernorm(y, g2, be2)

    # L2 normalize: y / max(||y||, 1e-8) == y * rsqrt(max(sum(y^2), 1e-16))
    inv = jax.lax.rsqrt(
        jnp.maximum(jnp.sum(y * y, axis=-1, keepdims=True), 1e-16)
    )
    o_ref[...] = (y * inv).astype(o_ref.dtype)


# ----------------------------------------------------------------------------
# wrapper
# ----------------------------------------------------------------------------
def _vmem_estimate_bytes(tb, din, h, dout):
    weights = 4 * (din * h + h * dout) + 4 * 3 * (h + dout)   # resident params
    io = 2 * 4 * tb * (din + dout)                            # double-buffered x / out
    inter = 8 * 4 * tb * h                                    # h + LN/GELU temporaries headroom
    return weights + io + inter + (2 << 20)


def _pick_batch_tile(b, din, h, dout):
    # Largest tile that divides B, stays (8,128)-legal and fits a 40 MiB budget
    # (safe on v7x's 64 MiB VMEM as well as v5e/v6e).
    for tb in (512, 256, 128, 64, 32, 16, 8):
        if b % tb == 0 and _vmem_estimate_bytes(tb, din, h, dout) <= (40 << 20):
            return tb
    return b  # fallback: whole batch in one step (block == full array is always legal)


def projection_head(x, params, *, batch_tile=None):
    B, Din = x.shape
    H = params["w1"].shape[1]
    Dout = params["w2"].shape[1]

    TB = batch_tile if batch_tile is not None else _pick_batch_tile(B, Din, H, Dout)
    if B % TB != 0:
        TB = B
    grid = (B // TB,)

    vmem_limit = int(min(max(_vmem_estimate_bytes(TB, Din, H, Dout), 16 << 20), 48 << 20))

    resident = lambda shape: pl.BlockSpec(shape, lambda i: (0, 0))

    return pl.pallas_call(
        projection_head_kernel,
        out_shape=jax.ShapeDtypeStruct((B, Dout), jnp.float32),
        grid=grid,
        in_specs=[
            pl.BlockSpec((TB, Din), lambda i: (i, 0)),   # x: streamed over batch
            resident((Din, H)),                          # w1
            resident((3, H)),                            # [b1, ln1_w, ln1_b]
            resident((H, Dout)),                         # w2
            resident((3, Dout)),                         # [b2, ln2_w, ln2_b]
        ],
        out_specs=pl.BlockSpec((TB, Dout), lambda i: (i, 0)),
        compiler_params=pltpu.CompilerParams(
            dimension_semantics=("parallel",),           # shards batch across v7x's 2 TCs
            vmem_limit_bytes=vmem_limit,
        ),
    )(x, params["w1"], params["p1"], params["w2"], params["p2"])


# ----------------------------------------------------------------------------
# params (matches PyTorch init: xavier_uniform(gain=0.01), zero biases,
# LayerNorm weight=1 / bias=0). Per-feature vectors are packed (3, dim).
# ----------------------------------------------------------------------------
def init_params(key, in_features, hidden_dim=512, out_dim=128, gain=0.01):
    k1, k2 = jax.random.split(key)

    def xavier_uniform(k, fan_in, fan_out):
        bound = gain * math.sqrt(6.0 / (fan_in + fan_out))
        # stored as (fan_in, fan_out): transpose of PyTorch's (out, in) layout
        return jax.random.uniform(
            k, (fan_in, fan_out), jnp.float32, minval=-bound, maxval=bound
        )

    def packed(dim):
        return jnp.stack(
            [jnp.zeros((dim,)), jnp.ones((dim,)), jnp.zeros((dim,))]
        ).astype(jnp.float32)  # rows: [linear bias, LN weight, LN bias]

    return {
        "w1": xavier_uniform(k1, in_features, hidden_dim),
        "p1": packed(hidden_dim),
        "w2": xavier_uniform(k2, hidden_dim, out_dim),
        "p2": packed(out_dim),
    }


# ----------------------------------------------------------------------------
# references
# ----------------------------------------------------------------------------
def _reference_bf16(x, p):
    # Matches the kernel's numerics exactly (bf16 MXU inputs, f32 accumulation).
    h = jnp.dot(x.astype(jnp.bfloat16), p["w1"].astype(jnp.bfloat16),
                preferred_element_type=jnp.float32) + p["p1"][0:1]
    h = _layernorm(h, p["p1"][1:2], p["p1"][2:3])
    h = _gelu_exact(h)
    y = jnp.dot(h.astype(jnp.bfloat16), p["w2"].astype(jnp.bfloat16),
                preferred_element_type=jnp.float32) + p["p2"][0:1]
    y = _layernorm(y, p["p2"][1:2], p["p2"][2:3])
    inv = jax.lax.rsqrt(jnp.maximum(jnp.sum(y * y, axis=-1, keepdims=True), 1e-16))
    return y * inv


def _reference_f32(x, p):
    # Full-f32 PyTorch-semantics reference (loose check: bf16 matmul noise only).
    h = x @ p["w1"] + p["p1"][0:1]
    h = _layernorm(h, p["p1"][1:2], p["p1"][2:3])
    h = jax.nn.gelu(h, approximate=False)
    y = h @ p["w2"] + p["p2"][0:1]
    y = _layernorm(y, p["p2"][1:2], p["p2"][2:3])
    n = jnp.maximum(jnp.linalg.norm(y, axis=-1, keepdims=True), 1e-8)
    return y / n


# ----------------------------------------------------------------------------
# self-test
# ----------------------------------------------------------------------------
if __name__ == "__main__":
    key = jax.random.PRNGKey(0)
    kx, kp = jax.random.split(key)

    B, IN_FEATURES, HIDDEN, OUT = 32, 32, 512, 128
    x = jax.random.normal(kx, (B, IN_FEATURES), jnp.float32)
    params = init_params(kp, IN_FEATURES, HIDDEN, OUT)

    # batch_tile=8 -> grid=(4,) so the batch pipeline is actually exercised.
    out = jax.block_until_ready(projection_head(x, params, batch_tile=8))
    assert out.shape == (B, OUT)

    # Strict check against a reference with identical (bf16-matmul) numerics.
    ref_bf16 = _reference_bf16(x, params)
    assert jnp.allclose(out, ref_bf16, atol=1e-4, rtol=1e-4)

    # Loose check against the full-f32 PyTorch-semantics reference
    # (difference is only the bf16 MXU inputs; output is L2-normalized, |err| ~ 1e-3).
    ref_f32 = _reference_f32(x, params)
    assert jnp.allclose(out, ref_f32, atol=3e-2, rtol=0.0)

    print("KERNEL_OK")
</pallas_src>

<mosaic_0001>
module attributes {stable_mosaic.version = 11 : i64} {
  func.func @projection_head_kernel(%arg0: i32, %arg1: memref<8x32xf32, #tpu.memory_space<vmem>>, %arg2: memref<32x512xf32, #tpu.memory_space<vmem>>, %arg3: memref<3x512xf32, #tpu.memory_space<vmem>>, %arg4: memref<512x128xf32, #tpu.memory_space<vmem>>, %arg5: memref<3x128xf32, #tpu.memory_space<vmem>>, %arg6: memref<8x128xf32, #tpu.memory_space<vmem>>) attributes {dimension_semantics = [#tpu.dimension_semantics<parallel>], iteration_bounds = array<i64: 4>, scalar_prefetch = 0 : i64, scratch_operands = 0 : i64, tpu.core_type = #tpu.core_type<tc>, window_params = [{transform_indices = @transform_0, window_bounds = array<i64: 8, 32>}, {pipeline_mode = #tpu.pipeline_mode<synchronous>, transform_indices = @transform_1, window_bounds = array<i64: 32, 512>}, {pipeline_mode = #tpu.pipeline_mode<synchronous>, transform_indices = @transform_2, window_bounds = array<i64: 3, 512>}, {pipeline_mode = #tpu.pipeline_mode<synchronous>, transform_indices = @transform_3, window_bounds = array<i64: 512, 128>}, {pipeline_mode = #tpu.pipeline_mode<synchronous>, transform_indices = @transform_4, window_bounds = array<i64: 3, 128>}, {transform_indices = @transform_5, window_bounds = array<i64: 8, 128>}]} {
    %c0 = arith.constant 0 : index
    %c0_0 = arith.constant 0 : index
    %0 = vector.load %arg1[%c0, %c0_0] : memref<8x32xf32, #tpu.memory_space<vmem>>, vector<8x32xf32>
    %1 = arith.truncf %0 : vector<8x32xf32> to vector<8x32xbf16>
    %c0_1 = arith.constant 0 : index
    %c0_2 = arith.constant 0 : index
    %2 = vector.load %arg2[%c0_1, %c0_2] : memref<32x512xf32, #tpu.memory_space<vmem>>, vector<32x512xf32>
    %3 = arith.truncf %2 : vector<32x512xf32> to vector<32x512xbf16>
    %c0_3 = arith.constant 0 : index
    %c0_4 = arith.constant 0 : index
    %4 = vector.load %arg4[%c0_3, %c0_4] : memref<512x128xf32, #tpu.memory_space<vmem>>, vector<512x128xf32>
    %5 = arith.truncf %4 : vector<512x128xf32> to vector<512x128xbf16>
    %c0_5 = arith.constant 0 : index
    %c0_6 = arith.constant 0 : index
    %6 = vector.load %arg3[%c0_5, %c0_6] : memref<3x512xf32, #tpu.memory_space<vmem>>, vector<1x512xf32>
    %c1 = arith.constant 1 : index
    %c0_7 = arith.constant 0 : index
    %7 = vector.load %arg3[%c1, %c0_7] : memref<3x512xf32, #tpu.memory_space<vmem>>, vector<1x512xf32>
    %c2 = arith.constant 2 : index
    %c0_8 = arith.constant 0 : index
    %8 = vector.load %arg3[%c2, %c0_8] : memref<3x512xf32, #tpu.memory_space<vmem>>, vector<1x512xf32>
    %c0_9 = arith.constant 0 : index
    %c0_10 = arith.constant 0 : index
    %9 = vector.load %arg5[%c0_9, %c0_10] : memref<3x128xf32, #tpu.memory_space<vmem>>, vector<1x128xf32>
    %c1_11 = arith.constant 1 : index
    %c0_12 = arith.constant 0 : index
    %10 = vector.load %arg5[%c1_11, %c0_12] : memref<3x128xf32, #tpu.memory_space<vmem>>, vector<1x128xf32>
    %c2_13 = arith.constant 2 : index
    %c0_14 = arith.constant 0 : index
    %11 = vector.load %arg5[%c2_13, %c0_14] : memref<3x128xf32, #tpu.memory_space<vmem>>, vector<1x128xf32>
    %cst = arith.constant dense<0.000000e+00> : vector<8x512xf32>
    %12 = tpu.matmul %1, %3, %cst {dimension_numbers = #tpu.dot_dimension_numbers<[1], [0], [0], [1], [0, 0, 1, 1], [], []>} : vector<8x32xbf16>, vector<32x512xbf16>, vector<8x512xf32> -> vector<8x512xf32>
    %13 = vector.broadcast %6 : vector<1x512xf32> to vector<8x512xf32>
    %14 = arith.addf %12, %13 : vector<8x512xf32>
    %cst_15 = arith.constant dense<0.000000e+00> : vector<8xf32>
    %15 = vector.multi_reduction <add>, %14, %cst_15 [1] : vector<8x512xf32> to vector<8xf32>
    %16 = vector.shape_cast %15 : vector<8xf32> to vector<8x1xf32>
    %cst_16 = arith.constant 5.120000e+02 : f32
    %17 = vector.broadcast %cst_16 : f32 to vector<8x1xf32>
    %18 = arith.divf %16, %17 : vector<8x1xf32>
    %19 = vector.broadcast %18 : vector<8x1xf32> to vector<8x512xf32>
    %20 = arith.subf %14, %19 : vector<8x512xf32>
    %21 = arith.mulf %20, %20 : vector<8x512xf32>
    %cst_17 = arith.constant dense<0.000000e+00> : vector<8xf32>
    %22 = vector.multi_reduction <add>, %21, %cst_17 [1] : vector<8x512xf32> to vector<8xf32>
    %23 = vector.shape_cast %22 : vector<8xf32> to vector<8x1xf32>
    %cst_18 = arith.constant 5.120000e+02 : f32
    %24 = vector.broadcast %cst_18 : f32 to vector<8x1xf32>
    %25 = arith.divf %23, %24 : vector<8x1xf32>
    %cst_19 = arith.constant 9.99999974E-6 : f32
    %26 = vector.broadcast %cst_19 : f32 to vector<8x1xf32>
    %27 = arith.addf %25, %26 : vector<8x1xf32>
    %28 = math.rsqrt %27 : vector<8x1xf32>
    %29 = vector.broadcast %28 : vector<8x1xf32> to vector<8x512xf32>
    %30 = arith.mulf %20, %29 : vector<8x512xf32>
    %31 = vector.broadcast %7 : vector<1x512xf32> to vector<8x512xf32>
    %32 = arith.mulf %30, %31 : vector<8x512xf32>
    %33 = vector.broadcast %8 : vector<1x512xf32> to vector<8x512xf32>
    %34 = arith.addf %32, %33 : vector<8x512xf32>
    %cst_20 = arith.constant 5.000000e-01 : f32
    %35 = vector.broadcast %cst_20 : f32 to vector<8x512xf32>
    %36 = arith.mulf %35, %34 : vector<8x512xf32>
    %cst_21 = arith.constant 0.707106769 : f32
    %37 = vector.broadcast %cst_21 : f32 to vector<8x512xf32>
    %38 = arith.mulf %34, %37 : vector<8x512xf32>
    %39 = math.erf %38 : vector<8x512xf32>
    %cst_22 = arith.constant 1.000000e+00 : f32
    %40 = vector.broadcast %cst_22 : f32 to vector<8x512xf32>
    %41 = arith.addf %40, %39 : vector<8x512xf32>
    %42 = arith.mulf %36, %41 : vector<8x512xf32>
    %43 = arith.truncf %42 : vector<8x512xf32> to vector<8x512xbf16>
    %cst_23 = arith.constant dense<0.000000e+00> : vector<8x128xf32>
    %44 = tpu.matmul %43, %5, %cst_23 {dimension_numbers = #tpu.dot_dimension_numbers<[1], [0], [0], [1], [0, 0, 1, 1], [], []>} : vector<8x512xbf16>, vector<512x128xbf16>, vector<8x128xf32> -> vector<8x128xf32>
    %45 = vector.broadcast %9 : vector<1x128xf32> to vector<8x128xf32>
    %46 = arith.addf %44, %45 : vector<8x128xf32>
    %cst_24 = arith.constant dense<0.000000e+00> : vector<8xf32>
    %47 = vector.multi_reduction <add>, %46, %cst_24 [1] : vector<8x128xf32> to vector<8xf32>
    %48 = vector.shape_cast %47 : vector<8xf32> to vector<8x1xf32>
    %cst_25 = arith.constant 1.280000e+02 : f32
    %49 = vector.broadcast %cst_25 : f32 to vector<8x1xf32>
    %50 = arith.divf %48, %49 : vector<8x1xf32>
    %51 = vector.broadcast %50 : vector<8x1xf32> to vector<8x128xf32>
    %52 = arith.subf %46, %51 : vector<8x128xf32>
    %53 = arith.mulf %52, %52 : vector<8x128xf32>
    %cst_26 = arith.constant dense<0.000000e+00> : vector<8xf32>
    %54 = vector.multi_reduction <add>, %53, %cst_26 [1] : vector<8x128xf32> to vector<8xf32>
    %55 = vector.shape_cast %54 : vector<8xf32> to vector<8x1xf32>
    %cst_27 = arith.constant 1.280000e+02 : f32
    %56 = vector.broadcast %cst_27 : f32 to vector<8x1xf32>
    %57 = arith.divf %55, %56 : vector<8x1xf32>
    %cst_28 = arith.constant 9.99999974E-6 : f32
    %58 = vector.broadcast %cst_28 : f32 to vector<8x1xf32>
    %59 = arith.addf %57, %58 : vector<8x1xf32>
    %60 = math.rsqrt %59 : vector<8x1xf32>
    %61 = vector.broadcast %60 : vector<8x1xf32> to vector<8x128xf32>
    %62 = arith.mulf %52, %61 : vector<8x128xf32>
    %63 = vector.broadcast %10 : vector<1x128xf32> to vector<8x128xf32>
    %64 = arith.mulf %62, %63 : vector<8x128xf32>
    %65 = vector.broadcast %11 : vector<1x128xf32> to vector<8x128xf32>
    %66 = arith.addf %64, %65 : vector<8x128xf32>
    %67 = arith.mulf %66, %66 : vector<8x128xf32>
    %cst_29 = arith.constant dense<0.000000e+00> : vector<8xf32>
    %68 = vector.multi_reduction <add>, %67, %cst_29 [1] : vector<8x128xf32> to vector<8xf32>
    %69 = vector.shape_cast %68 : vector<8xf32> to vector<8x1xf32>
    %cst_30 = arith.constant 1.000000e-16 : f32
    %70 = vector.broadcast %cst_30 : f32 to vector<8x1xf32>
    %71 = arith.maximumf %69, %70 : vector<8x1xf32>
    %72 = math.rsqrt %71 : vector<8x1xf32>
    %73 = vector.broadcast %72 : vector<8x1xf32> to vector<8x128xf32>
    %74 = arith.mulf %66, %73 : vector<8x128xf32>
    %c0_31 = arith.constant 0 : index
    %c0_32 = arith.constant 0 : index
    %75 = vector.load %arg6[%c0_31, %c0_32] : memref<8x128xf32, #tpu.memory_space<vmem>>, vector<8x128xf32>
    tpu.vector_store %arg6[%c0_31, %c0_32], %74 {strides = array<i32>} : memref<8x128xf32, #tpu.memory_space<vmem>>, vector<8x128xf32>,
    return
  }
  func.func @transform_0(%arg0: i32) -> (i32, i32) {
    %c0_i32 = arith.constant 0 : i32
    %c0_i32_0 = arith.constant 0 : i32
    return %arg0, %c0_i32 : i32, i32
  }
  func.func @transform_1(%arg0: i32) -> (i32, i32) {
    %c0_i32 = arith.constant 0 : i32
    %c0_i32_0 = arith.constant 0 : i32
    %c0_i32_1 = arith.constant 0 : i32
    return %c0_i32, %c0_i32_0 : i32, i32
  }
  func.func @transform_2(%arg0: i32) -> (i32, i32) {
    %c0_i32 = arith.constant 0 : i32
    %c0_i32_0 = arith.constant 0 : i32
    %c0_i32_1 = arith.constant 0 : i32
    return %c0_i32, %c0_i32_0 : i32, i32
  }
  func.func @transform_3(%arg0: i32) -> (i32, i32) {
    %c0_i32 = arith.constant 0 : i32
    %c0_i32_0 = arith.constant 0 : i32
    %c0_i32_1 = arith.constant 0 : i32
    return %c0_i32, %c0_i32_0 : i32, i32
  }
  func.func @transform_4(%arg0: i32) -> (i32, i32) {
    %c0_i32 = arith.constant 0 : i32
    %c0_i32_0 = arith.constant 0 : i32
    %c0_i32_1 = arith.constant 0 : i32
    return %c0_i32, %c0_i32_0 : i32, i32
  }
  func.func @transform_5(%arg0: i32) -> (i32, i32) {
    %c0_i32 = arith.constant 0 : i32
    %c0_i32_0 = arith.constant 0 : i32
    return %arg0, %c0_i32 : i32, i32
  }
}

</mosaic_0001>

<llo_original>
// kernel: tpu_custom_call.1
$region0: #{tpu_custom_call.1}
  #allocation0 [shape = 'u32[]', space=smem, size = 0x4, offset = 0x4, fixed_abs, tag = 'smem constant byte address 0x4 - core index']
  #allocation1 [shape = 'u32[144,128]{1,0:T(1,128)}', space=vmem, size = 0x12000, scoped, tag = 'internal scratch']
  %s0 = inlined_call_operand.hbm [shape: f32[32,32], index: 0, kind: input, shape index: {}]
  %s1 = inlined_call_operand.hbm [shape: f32[32,512], index: 1, kind: input, shape index: {}]
  %s2 = inlined_call_operand.hbm [shape: f32[3,512], index: 2, kind: input, shape index: {}]
  %s3 = inlined_call_operand.hbm [shape: f32[512,128], index: 3, kind: input, shape index: {}]
  %s4 = inlined_call_operand.vmem [shape: f32[3,128], index: 4, kind: input, shape index: {}]
  %s5 = inlined_call_operand.hbm [shape: f32[32,128], index: 5, kind: output, shape index: {}]
  %s6 = sld [smem:[#allocation0]]
  $region69: #{tpu_custom_call.1} parent=0
    _
  %s8 = ssub.s32 1, %s6
  %s9 = scalar_select 0, %s8, %s6
  $region1: #{tpu_custom_call.1} parent=0
    #allocation2 [shape = 'u8[8192]{0}', space=vmem, size = 0x2000, scoped, tag = 'input window, operand 0']
    #allocation3 [shape = 's32[2]{0}', space=sflag, size = 0x8, scoped, tag = 'scoped memory for tpu_custom_call.1']
    #allocation4 [shape = 's32[2]{0}', space=sflag, size = 0x8, scoped, tag = 'scoped memory for tpu_custom_call.1']
    #allocation5 [shape = 'u8[65536]{0}', space=vmem, size = 0x10000, scoped, tag = 'input window, operand 1, single buffered']
    #allocation6 [shape = 's32[1]{0}', space=sflag, size = 0x4, scoped, tag = 'scoped memory for tpu_custom_call.1']
    #allocation7 [shape = 'u8[8192]{0}', space=vmem, size = 0x2000, scoped, tag = 'input window, operand 2, single buffered']
    #allocation8 [shape = 'u8[262144]{0}', space=vmem, size = 0x40000, scoped, tag = 'input window, operand 3, single buffered']
    #allocation9 [shape = 's32[1]{0}', space=sflag, size = 0x4, scoped, tag = 'scoped memory for tpu_custom_call.1']
    #allocation10 [shape = 'u8[8192]{0}', space=vmem, size = 0x2000, scoped, tag = 'output window, operand 0']
    %10 = vsyncpa [#allocation3], 0
    %s11 = scalar_lea.sflag [#allocation3], 1
    %12 = vsyncpa %s11, 0
    %13 = vsyncpa [#allocation6], 0
    %14 = vsyncpa [#allocation9], 0
    %15 = vsyncpa [#allocation4], 0
    %s16 = scalar_lea.sflag [#allocation4], 1
    %17 = vsyncpa %s16, 0
    loop: start=0, step=1, limit=6
    $region2: #{tpu_custom_call.1} parent=1 // loop_pre_header
      _
    $region3: #{tpu_custom_call.1} parent=1 // loop_header
      %s19 = sphi 0, %s23
      %p20 = scmp.ge.s32.totalorder %s19, 6
      %s29 = sphi 0, %s31
      %s32 = sphi 0, %s29
      %s33 = sphi 0, %s32
      %s49 = sphi 0, %s33
      %s53 = sphi 0, %s53
      %s55 = sphi 0, %s53
      %s56 = sphi 0, %s55
      %s70 = sphi 0, %s56
      %s74 = sphi 0, %s74
      %s76 = sphi 0, %s74
      %s77 = sphi 0, %s76
      %s91 = sphi 0, %s77
      %s95 = sphi 0, %s95
      %s97 = sphi 0, %s95
      %s98 = sphi 0, %s97
      %s112 = sphi 0, %s98
      %s116 = sphi 0, %s116
      %s118 = sphi 0, %s116
      %s119 = sphi 0, %s118
      %s133 = sphi 0, %s119
      %s139 = sphi 0, %s141
      %s142 = sphi 0, %s139
      %s143 = sphi 0, %s142
      %s159 = sphi 0, %s143
    $region4: #{tpu_custom_call.1} parent=1 // loop_header_branch
      %22 = sbr.rel (%p20) target = $region8
    $region5: #{tpu_custom_call.1} parent=1 // loop_body
      %s24 = ssub.s32 %s19, 1
      %s25 = ssub.s32 %s19, 2
      %s26 = sadd.s32 %s19, 1
      %s27 = ssub.s32 %s19, %s26
      %p28 = scmp.eq.s32.totalorder %s27, 0
      %s30 = sadd.s32 %s29, 1
      %s31 = scalar_select %p28, %s29, %s30
      %p34 = pneg %p28
      %p35 = scmp.eq.s32.totalorder %s19, 3
      %p36 = por %p34, %p35
      %p37 = scmp.ne.s32.totalorder %s29, %s32
      %p38 = scmp.eq.s32.totalorder %s19, 0
      %p39 = por %p37, %p38
      %p40 = scmp.ne.s32.totalorder %s29, %s32
      %p41 = scmp.eq.s32.totalorder %s24, 3
      %p42 = por %p40, %p41
      %p43 = scmp.ne.s32.totalorder %s32, %s33
      %p44 = scmp.eq.s32.totalorder %s24, 0
      %p45 = por %p43, %p44
      %p46 = scmp.ne.s32.totalorder %s32, %s33
      %p47 = scmp.eq.s32.totalorder %s25, 3
      %p48 = por %p46, %p47
      %p50 = scmp.ne.s32.totalorder %s33, %s49
      %p51 = scmp.eq.s32.totalorder %s25, 0
      %p52 = por %p50, %p51
      %s54 = sadd.s32 %s53, 1
      %p57 = scmp.eq.s32.totalorder %s19, 3
      %p58 = scmp.ne.s32.totalorder %s53, %s55
      %p59 = scmp.eq.s32.totalorder %s19, 0
      %p60 = por %p58, %p59
      %p61 = scmp.ne.s32.totalorder %s53, %s55
      %p62 = scmp.eq.s32.totalorder %s24, 3
      %p63 = por %p61, %p62
      %p64 = scmp.ne.s32.totalorder %s55, %s56
      %p65 = scmp.eq.s32.totalorder %s24, 0
      %p66 = por %p64, %p65
      %p67 = scmp.ne.s32.totalorder %s55, %s56
      %p68 = scmp.eq.s32.totalorder %s25, 3
      %p69 = por %p67, %p68
      %p71 = scmp.ne.s32.totalorder %s56, %s70
      %p72 = scmp.eq.s32.totalorder %s25, 0
      %p73 = por %p71, %p72
      %s75 = sadd.s32 %s74, 1
      %p78 = scmp.eq.s32.totalorder %s19, 3
      %p79 = scmp.ne.s32.totalorder %s74, %s76
      %p80 = scmp.eq.s32.totalorder %s19, 0
      %p81 = por %p79, %p80
      %p82 = scmp.ne.s32.totalorder %s74, %s76
      %p83 = scmp.eq.s32.totalorder %s24, 3
      %p84 = por %p82, %p83
      %p85 = scmp.ne.s32.totalorder %s76, %s77
      %p86 = scmp.eq.s32.totalorder %s24, 0
      %p87 = por %p85, %p86
      %p88 = scmp.ne.s32.totalorder %s76, %s77
      %p89 = scmp.eq.s32.totalorder %s25, 3
      %p90 = por %p88, %p89
      %p92 = scmp.ne.s32.totalorder %s77, %s91
      %p93 = scmp.eq.s32.totalorder %s25, 0
      %p94 = por %p92, %p93
      %s96 = sadd.s32 %s95, 1
      %p99 = scmp.eq.s32.totalorder %s19, 3
      %p100 = scmp.ne.s32.totalorder %s95, %s97
      %p101 = scmp.eq.s32.totalorder %s19, 0
      %p102 = por %p100, %p101
      %p103 = scmp.ne.s32.totalorder %s95, %s97
      %p104 = scmp.eq.s32.totalorder %s24, 3
      %p105 = por %p103, %p104
      %p106 = scmp.ne.s32.totalorder %s97, %s98
      %p107 = scmp.eq.s32.totalorder %s24, 0
      %p108 = por %p106, %p107
      %p109 = scmp.ne.s32.totalorder %s97, %s98
      %p110 = scmp.eq.s32.totalorder %s25, 3
      %p111 = por %p109, %p110
      %p113 = scmp.ne.s32.totalorder %s98, %s112
      %p114 = scmp.eq.s32.totalorder %s25, 0
      %p115 = por %p113, %p114
      %s117 = sadd.s32 %s116, 1
      %p120 = scmp.eq.s32.totalorder %s19, 3
      %p121 = scmp.ne.s32.totalorder %s116, %s118
      %p122 = scmp.eq.s32.totalorder %s19, 0
      %p123 = por %p121, %p122
      %p124 = scmp.ne.s32.totalorder %s116, %s118
      %p125 = scmp.eq.s32.totalorder %s24, 3
      %p126 = por %p124, %p125
      %p127 = scmp.ne.s32.totalorder %s118, %s119
      %p128 = scmp.eq.s32.totalorder %s24, 0
      %p129 = por %p127, %p128
      %p130 = scmp.ne.s32.totalorder %s118, %s119
      %p131 = scmp.eq.s32.totalorder %s25, 3
      %p132 = por %p130, %p131
      %p134 = scmp.ne.s32.totalorder %s119, %s133
      %p135 = scmp.eq.s32.totalorder %s25, 0
      %p136 = por %p134, %p135
      %s137 = ssub.s32 %s19, %s26
      %p138 = scmp.eq.s32.totalorder %s137, 0
      %s140 = sadd.s32 %s139, 1
      %s141 = scalar_select %p138, %s139, %s140
      %p144 = pneg %p138
      %p145 = scmp.eq.s32.totalorder %s19, 3
      %p146 = por %p144, %p145
      %p147 = scmp.ne.s32.totalorder %s139, %s142
      %p148 = scmp.eq.s32.totalorder %s19, 0
      %p149 = por %p147, %p148
      %p150 = scmp.ne.s32.totalorder %s139, %s142
      %p151 = scmp.eq.s32.totalorder %s24, 3
      %p152 = por %p150, %p151
      %p153 = scmp.ne.s32.totalorder %s142, %s143
      %p154 = scmp.eq.s32.totalorder %s24, 0
      %p155 = por %p153, %p154
      %p156 = scmp.ne.s32.totalorder %s142, %s143
      %p157 = scmp.eq.s32.totalorder %s25, 3
      %p158 = por %p156, %p157
      %p160 = scmp.ne.s32.totalorder %s143, %s159
      %p161 = scmp.eq.s32.totalorder %s25, 0
      %p162 = por %p160, %p161
      %p163 = scmp.le.s32.totalorder 1, %s19
      %p164 = scmp.lt.s32.totalorder %s19, 5
      %p165 = pnand %p163, %p164
      %p166 = pneg %p165
      // Predicated region
      $region9: #{tpu_custom_call.1} parent=5 // pred_check
        _
      $region10: #{tpu_custom_call.1} parent=5 // pred_check_branch
        %168 = sbr.rel (%p165) target = $region12
      $region11: #{tpu_custom_call.1} parent=5 // pred_region
        %s169 = ssub.s32 %s19, 1
        // Predicated region
        $region13: #{tpu_custom_call.1} parent=11 // pred_check
          %p170 = pneg %p66
        $region14: #{tpu_custom_call.1} parent=11 // pred_check_branch
          %172 = sbr.rel (%p170) target = $region16
        $region15: #{tpu_custom_call.1} parent=11 // pred_region
          %s174 = ssub.s32 2048, 2048
          %175 = vsyncadd [#allocation6], %s174
          %s176 = sshll.u32 [#allocation5], 4
          %s177 = int_to_ptr.vmem [resolvable:$true] %s176
          %182 = dma.hbm_to_vmem [thread:$0]  %s1, 2048, %s177, [#allocation6], 512, 512, 32
        $region16: #{tpu_custom_call.1} parent=11 // pred_fallthru
          _
        // Predicated region
        $region17: #{tpu_custom_call.1} parent=11 // pred_check
          %p183 = pneg %p87
        $region18: #{tpu_custom_call.1} parent=11 // pred_check_branch
          %185 = sbr.rel (%p183) target = $region20
        $region19: #{tpu_custom_call.1} parent=11 // pred_region
          %s187 = ssub.s32 256, 256
          %188 = vsyncadd [#allocation6], %s187
          %s190 = sshll.u32 [#allocation7], 4
          %s191 = int_to_ptr.vmem [resolvable:$true] %s190
          %193 = dma.hbm_to_vmem [thread:$0]  %s2, 256, %s191, [#allocation6]
        $region20: #{tpu_custom_call.1} parent=11 // pred_fallthru
          _
        // Predicated region
        $region21: #{tpu_custom_call.1} parent=11 // pred_check
          %p194 = pneg %p108
        $region22: #{tpu_custom_call.1} parent=11 // pred_check_branch
          %196 = sbr.rel (%p194) target = $region24
        $region23: #{tpu_custom_call.1} parent=11 // pred_region
          %s198 = ssub.s32 8192, 8192
          %199 = vsyncadd [#allocation9], %s198
          %s200 = sshll.u32 [#allocation8], 4
          %s201 = int_to_ptr.vmem [resolvable:$true] %s200
          %206 = dma.hbm_to_vmem [thread:$0]  %s3, 8192, %s201, [#allocation9], 128, 128, 8
        $region24: #{tpu_custom_call.1} parent=11 // pred_fallthru
          _
        // Predicated region
        $region25: #{tpu_custom_call.1} parent=11 // pred_check
          %p207 = pneg %p129
        $region26: #{tpu_custom_call.1} parent=11 // pred_check_branch
          %209 = sbr.rel (%p207) target = $region28
        $region27: #{tpu_custom_call.1} parent=11 // pred_region
          _
        $region28: #{tpu_custom_call.1} parent=11 // pred_fallthru
          _
      $region12: #{tpu_custom_call.1} parent=5 // pred_fallthru
        _
      %p210 = scmp.lt.s32.totalorder %s19, 4
      // Predicated region
      $region29: #{tpu_custom_call.1} parent=5 // pred_check
        %p211 = pneg %p210
      $region30: #{tpu_custom_call.1} parent=5 // pred_check_branch
        %213 = sbr.rel (%p211) target = $region32
      $region31: #{tpu_custom_call.1} parent=5 // pred_region
        // Predicated region
        $region33: #{tpu_custom_call.1} parent=31 // pred_check
          %p214 = pneg %p39
        $region34: #{tpu_custom_call.1} parent=31 // pred_check_branch
          %216 = sbr.rel (%p214) target = $region36
        $region35: #{tpu_custom_call.1} parent=31 // pred_region
          %s217 = sand.u32 %s29, 1
          %s218 = scalar_lea.sflag [#allocation3], %s217
          %s219 = sand.u32 %s29, 1
          %s220 = smul.addr %s219, 8
          %s221 = scalar_lea.vmem [#allocation2], %s220
          %s223 = ssub.s32 128, 128
          %224 = vsyncadd %s218, %s223
          %s225 = smul.addr %s19, 128
          %s226 = scalar_lea.hbm %s0, %s225
          %s228 = sshll.u32 %s221, 4
          %s229 = int_to_ptr.vmem [resolvable:$true] %s228
          %231 = dma.hbm_to_vmem [thread:$0]  %s226, 128, %s229, %s218
        $region36: #{tpu_custom_call.1} parent=31 // pred_fallthru
          _
      $region32: #{tpu_custom_call.1} parent=5 // pred_fallthru
        _
      %p232 = scmp.le.s32.totalorder 1, %s19
      %p233 = scmp.lt.s32.totalorder %s19, 5
      %p234 = pnand %p232, %p233
      %p235 = pneg %p234
      // Predicated region
      $region37: #{tpu_custom_call.1} parent=5 // pred_check
        _
      $region38: #{tpu_custom_call.1} parent=5 // pred_check_branch
        %237 = sbr.rel (%p234) target = $region40
      $region39: #{tpu_custom_call.1} parent=5 // pred_region
        %s238 = ssub.s32 %s19, 1
        %s239 = sand.u32 %s32, 1
        %s240 = scalar_lea.sflag [#allocation3], %s239
        %s241 = sand.u32 %s32, 1
        %s242 = smul.addr %s241, 8
        %s243 = scalar_lea.vmem [#allocation2], %s242
        // Predicated region
        $region41: #{tpu_custom_call.1} parent=39 // pred_check
          %p244 = pneg %p45
        $region42: #{tpu_custom_call.1} parent=39 // pred_check_branch
          %246 = sbr.rel (%p244) target = $region44
        $region43: #{tpu_custom_call.1} parent=39 // pred_region
          %247 = dma.done %s240, 128
        $region44: #{tpu_custom_call.1} parent=39 // pred_fallthru
          _
        // Predicated region
        $region45: #{tpu_custom_call.1} parent=39 // pred_check
          %p248 = pneg %p66
        $region46: #{tpu_custom_call.1} parent=39 // pred_check_branch
          %250 = sbr.rel (%p248) target = $region48
        $region47: #{tpu_custom_call.1} parent=39 // pred_region
          %251 = dma.done [#allocation6], 2048
        $region48: #{tpu_custom_call.1} parent=39 // pred_fallthru
          _
        // Predicated region
        $region49: #{tpu_custom_call.1} parent=39 // pred_check
          %p252 = pneg %p87
        $region50: #{tpu_custom_call.1} parent=39 // pred_check_branch
          %254 = sbr.rel (%p252) target = $region52
        $region51: #{tpu_custom_call.1} parent=39 // pred_region
          %255 = dma.done [#allocation6], 256
        $region52: #{tpu_custom_call.1} parent=39 // pred_fallthru
          _
        // Predicated region
        $region53: #{tpu_custom_call.1} parent=39 // pred_check
          %p256 = pneg %p108
        $region54: #{tpu_custom_call.1} parent=39 // pred_check_branch
          %258 = sbr.rel (%p256) target = $region56
        $region55: #{tpu_custom_call.1} parent=39 // pred_region
          %259 = dma.done [#allocation9], 8192
        $region56: #{tpu_custom_call.1} parent=39 // pred_fallthru
          _
        %s260 = sand.u32 %s32, 1
        %s261 = scalar_lea.sflag [#allocation3], %s260
        %s262 = sand.u32 %s32, 1
        %s263 = smul.addr %s262, 8
        %s264 = scalar_lea.vmem [#allocation2], %s263
        %p265 = pneg %p45
        %p266 = pneg %p42
        %p267 = pneg %p66
        %p268 = pneg %p63
        %p269 = pneg %p87
        %p270 = pneg %p84
        %p271 = pneg %p108
        %p272 = pneg %p105
        %p273 = pneg %p129
        %p274 = pneg %p126
        %p275 = pneg %p155
        %p276 = pneg %p152
        %s277 = sand.u32 %s142, 1
        %s278 = scalar_lea.sflag [#allocation4], %s277
        %s279 = sand.u32 %s142, 1
        %s280 = smul.addr %s279, 8
        %s281 = scalar_lea.vmem [#allocation10], %s280
        %v283 = vld [vmem:[%s243] sm:$0xff]
        %v284 = vpack.c.bf16 %v283, %v283
        %v285 = vld [vmem:[#allocation5] sm:$0xff]
        %v286 = vld [vmem:[#allocation5 + $0x8] sm:$0xff]
        %v287 = vld [vmem:[#allocation5 + $0x10] sm:$0xff]
        %v288 = vld [vmem:[#allocation5 + $0x18] sm:$0xff]
        %v289 = vld [vmem:[#allocation5 + $0x20] sm:$0xff]
        %v290 = vld [vmem:[#allocation5 + $0x28] sm:$0xff]
        %v291 = vld [vmem:[#allocation5 + $0x30] sm:$0xff]
        %v292 = vld [vmem:[#allocation5 + $0x38] sm:$0xff]
        %v293 = vld [vmem:[#allocation5 + $0x40] sm:$0xff]
        %v294 = vld [vmem:[#allocation5 + $0x48] sm:$0xff]
        %v295 = vld [vmem:[#allocation5 + $0x50] sm:$0xff]
        %v296 = vld [vmem:[#allocation5 + $0x58] sm:$0xff]
        %v297 = vld [vmem:[#allocation5 + $0x60] sm:$0xff]
        %v298 = vld [vmem:[#allocation5 + $0x68] sm:$0xff]
        %v299 = vld [vmem:[#allocation5 + $0x70] sm:$0xff]
        %v300 = vld [vmem:[#allocation5 + $0x78] sm:$0xff]
        %v301 = vpack.c.bf16 %v289, %v285
        %v302 = vpack.c.bf16 %v290, %v286
        %v303 = vpack.c.bf16 %v291, %v287
        %v304 = vpack.c.bf16 %v292, %v288
        %v305 = vpack.c.bf16 %v297, %v293
        %v306 = vpack.c.bf16 %v298, %v294
        %v307 = vpack.c.bf16 %v299, %v295
        %v308 = vpack.c.bf16 %v300, %v296
        %v309 = vld [vmem:[#allocation8] sm:$0xff]
        %v310 = vld [vmem:[#allocation8 + $0x8] sm:$0xff]
        %v311 = vld [vmem:[#allocation8 + $0x10] sm:$0xff]
        %v312 = vld [vmem:[#allocation8 + $0x18] sm:$0xff]
        %v313 = vld [vmem:[#allocation8 + $0x20] sm:$0xff]
        %v314 = vld [vmem:[#allocation8 + $0x28] sm:$0xff]
        %v315 = vld [vmem:[#allocation8 + $0x30] sm:$0xff]
        %v316 = vld [vmem:[#allocation8 + $0x38] sm:$0xff]
        %v317 = vld [vmem:[#allocation8 + $0x40] sm:$0xff]
        %v318 = vld [vmem:[#allocation8 + $0x48] sm:$0xff]
        %v319 = vld [vmem:[#allocation8 + $0x50] sm:$0xff]
        %v320 = vld [vmem:[#allocation8 + $0x58] sm:$0xff]
        %v321 = vld [vmem:[#allocation8 + $0x60] sm:$0xff]
        %v322 = vld [vmem:[#allocation8 + $0x68] sm:$0xff]
        %v323 = vld [vmem:[#allocation8 + $0x70] sm:$0xff]
        %v324 = vld [vmem:[#allocation8 + $0x78] sm:$0xff]
        %v325 = vld [vmem:[#allocation8 + $0x80] sm:$0xff]
        %v326 = vld [vmem:[#allocation8 + $0x88] sm:$0xff]
        %v327 = vld [vmem:[#allocation8 + $0x90] sm:$0xff]
        %v328 = vld [vmem:[#allocation8 + $0x98] sm:$0xff]
        %v329 = vld [vmem:[#allocation8 + $0xa0] sm:$0xff]
        %v330 = vld [vmem:[#allocation8 + $0xa8] sm:$0xff]
        %v331 = vld [vmem:[#allocation8 + $0xb0] sm:$0xff]
        %v332 = vld [vmem:[#allocation8 + $0xb8] sm:$0xff]
        %v333 = vld [vmem:[#allocation8 + $0xc0] sm:$0xff]
        %v334 = vld [vmem:[#allocation8 + $0xc8] sm:$0xff]
        %v335 = vld [vmem:[#allocation8 + $0xd0] sm:$0xff]
        %v336 = vld [vmem:[#allocation8 + $0xd8] sm:$0xff]
        %v337 = vld [vmem:[#allocation8 + $0xe0] sm:$0xff]
        %v338 = vld [vmem:[#allocation8 + $0xe8] sm:$0xff]
        %v339 = vld [vmem:[#allocation8 + $0xf0] sm:$0xff]
        %v340 = vld [vmem:[#allocation8 + $0xf8] sm:$0xff]
        %v341 = vld [vmem:[#allocation8 + $0x100] sm:$0xff]
        %v342 = vld [vmem:[#allocation8 + $0x108] sm:$0xff]
        %v343 = vld [vmem:[#allocation8 + $0x110] sm:$0xff]
        %v344 = vld [vmem:[#allocation8 + $0x118] sm:$0xff]
        %v345 = vld [vmem:[#allocation8 + $0x120] sm:$0xff]
        %v346 = vld [vmem:[#allocation8 + $0x128] sm:$0xff]
        %v347 = vld [vmem:[#allocation8 + $0x130] sm:$0xff]
        %v348 = vld [vmem:[#allocation8 + $0x138] sm:$0xff]
        %v349 = vld [vmem:[#allocation8 + $0x140] sm:$0xff]
        %v350 = vld [vmem:[#allocation8 + $0x148] sm:$0xff]
        %v351 = vld [vmem:[#allocation8 + $0x150] sm:$0xff]
        %v352 = vld [vmem:[#allocation8 + $0x158] sm:$0xff]
        %v353 = vld [vmem:[#allocation8 + $0x160] sm:$0xff]
        %v354 = vld [vmem:[#allocation8 + $0x168] sm:$0xff]
        %v355 = vld [vmem:[#allocation8 + $0x170] sm:$0xff]
        %v356 = vld [vmem:[#allocation8 + $0x178] sm:$0xff]
        %v357 = vld [vmem:[#allocation8 + $0x180] sm:$0xff]
        %v358 = vld [vmem:[#allocation8 + $0x188] sm:$0xff]
        %v359 = vld [vmem:[#allocation8 + $0x190] sm:$0xff]
        %v360 = vld [vmem:[#allocation8 + $0x198] sm:$0xff]
        %v361 = vld [vmem:[#allocation8 + $0x1a0] sm:$0xff]
        %v362 = vld [vmem:[#allocation8 + $0x1a8] sm:$0xff]
        %v363 = vld [vmem:[#allocation8 + $0x1b0] sm:$0xff]
        %v364 = vld [vmem:[#allocation8 + $0x1b8] sm:$0xff]
        %v365 = vld [vmem:[#allocation8 + $0x1c0] sm:$0xff]
        %v366 = vld [vmem:[#allocation8 + $0x1c8] sm:$0xff]
        %v367 = vld [vmem:[#allocation8 + $0x1d0] sm:$0xff]
        %v368 = vld [vmem:[#allocation8 + $0x1d8] sm:$0xff]
        %v369 = vld [vmem:[#allocation8 + $0x1e0] sm:$0xff]
        %v370 = vld [vmem:[#allocation8 + $0x1e8] sm:$0xff]
        %v371 = vld [vmem:[#allocation8 + $0x1f0] sm:$0xff]
        %v372 = vld [vmem:[#allocation8 + $0x1f8] sm:$0xff]
        %v373 = vpack.c.bf16 %v310, %v309
        %v374 = vpack.c.bf16 %v312, %v311
        %v375 = vpack.c.bf16 %v314, %v313
        %v376 = vpack.c.bf16 %v316, %v315
        %v377 = vpack.c.bf16 %v318, %v317
        %v378 = vpack.c.bf16 %v320, %v319
        %v379 = vpack.c.bf16 %v322, %v321
        %v380 = vpack.c.bf16 %v324, %v323
        %v381 = vpack.c.bf16 %v326, %v325
        %v382 = vpack.c.bf16 %v328, %v327
        %v383 = vpack.c.bf16 %v330, %v329
        %v384 = vpack.c.bf16 %v332, %v331
        %v385 = vpack.c.bf16 %v334, %v333
        %v386 = vpack.c.bf16 %v336, %v335
        %v387 = vpack.c.bf16 %v338, %v337
        %v388 = vpack.c.bf16 %v340, %v339
        %v389 = vpack.c.bf16 %v342, %v341
        %v390 = vpack.c.bf16 %v344, %v343
        %v391 = vpack.c.bf16 %v346, %v345
        %v392 = vpack.c.bf16 %v348, %v347
        %v393 = vpack.c.bf16 %v350, %v349
        %v394 = vpack.c.bf16 %v352, %v351
        %v395 = vpack.c.bf16 %v354, %v353
        %v396 = vpack.c.bf16 %v356, %v355
        %v397 = vpack.c.bf16 %v358, %v357
        %v398 = vpack.c.bf16 %v360, %v359
        %v399 = vpack.c.bf16 %v362, %v361
        %v400 = vpack.c.bf16 %v364, %v363
        %v401 = vpack.c.bf16 %v366, %v365
        %v402 = vpack.c.bf16 %v368, %v367
        %v403 = vpack.c.bf16 %v370, %v369
        %v404 = vpack.c.bf16 %v372, %v371
        %v405 = vld [vmem:[#allocation7] ss:$4 sm:$0xf]
        %s406 = scalar_lea.vmem [#allocation7], 1
        %v407 = vld [vmem:[%s406] ss:$4 sm:$0xf]
        %s408 = scalar_lea.vmem [#allocation7], 2
        %v409 = vld [vmem:[%s408] ss:$4 sm:$0xf]
        %v410 = vld [vmem:[%s4] sm:$0x1]
        %v411 = vld [vmem:[%s4 + $0x1] sm:$0x1]
        %v412 = vld [vmem:[%s4 + $0x2] sm:$0x1]
        %v414 = vlaneseq
        %v415 = vshrl.u32 %v414, 7
        %v416 = vsub.s32 0, %v415
        %v417 = vrot.slane %v405, %v416
        %v418 = vlaneseq
        %v419 = vshrl.u32 %v418, 7
        %v420 = vsub.s32 1, %v419
        %v421 = vrot.slane %v405, %v420
        %v422 = vlaneseq
        %v423 = vshrl.u32 %v422, 7
        %v424 = vsub.s32 2, %v423
        %v425 = vrot.slane %v405, %v424
        %v426 = vlaneseq
        %v427 = vshrl.u32 %v426, 7
        %v428 = vsub.s32 3, %v427
        %v429 = vrot.slane %v405, %v428
        %vm434 = vcmask 261120
        %v436 = vsel %vm434, %v284, 0
        %438 = vmatprep.subr.bf16.mxu0 0
        %439 = vmatpush1.bf16.msra.mxu0 0
        %440 = vmatprep.subr.bf16.mxu0 0
        %441 = vmatpush1.bf16.msra.mxu0 0
        %442 = vmatprep.subr.bf16.mxu0 0
        %443 = vmatpush1.bf16.msra.mxu0 0
        %444 = vmatprep.subr.bf16.mxu0 0
        %445 = vmatpush1.bf16.msra.mxu0 0
        %446 = vmatprep.subr.bf16.mxu0 0
        %447 = vmatpush1.bf16.msra.mxu0 0
        %448 = vmatprep.subr.bf16.mxu0 0
        %449 = vmatpush1.bf16.msra.mxu0 0
        %450 = vmatprep.subr.bf16.mxu0 %v306
        %451 = vmatpush1.bf16.msra.mxu0 %v305
        %452 = vmatprep.subr.bf16.mxu0 %v302
        %453 = vmatpush1.bf16.msra.mxu0 %v301
        %454 = vmatprep.subr.bf16.mxu0 0
        %455 = vmatpush2.bf16.msra.mxu0 0
        %456 = vmatprep.subr.bf16.mxu0 0
        %457 = vmatpush2.bf16.msra.mxu0 0
        %458 = vmatprep.subr.bf16.mxu0 0
        %459 = vmatpush2.bf16.msra.mxu0 0
        %460 = vmatprep.subr.bf16.mxu0 0
        %461 = vmatpush2.bf16.msra.mxu0 0
        %462 = vmatprep.subr.bf16.mxu0 0
        %463 = vmatpush2.bf16.msra.mxu0 0
        %464 = vmatprep.subr.bf16.mxu0 0
        %465 = vmatpush2.bf16.msra.mxu0 0
        %466 = vmatprep.subr.bf16.mxu0 0
        %467 = vmatpush2.bf16.msra.mxu0 0
        %468 = vmatprep.subr.bf16.mxu0 0
        %469 = vmatpush2.bf16.msra.mxu0 0
        %470 = vmatprep.mubr.bf16.mxu0 0
        %471 = vmatmul.mubr.bf16.gmra.mxu0 %v436
        %v472 = vpop.f32.mrf.mxu0
        %v473 = vadd.f32 %v417, %v472
        %v474 = vpop.f32.mrf.mxu0
        %v475 = vadd.f32 %v421, %v474
        %v476 = vpop.f32.mrf.mxu0
        %v477 = vpop.f32.mrf.mxu0
        %478 = vdwg.mxu0
        %479 = vmatprep.subr.bf16.mxu0 0
        %480 = vmatpush1.bf16.msra.mxu0 0
        %481 = vmatprep.subr.bf16.mxu0 0
        %482 = vmatpush1.bf16.msra.mxu0 0
        %483 = vmatprep.subr.bf16.mxu0 0
        %484 = vmatpush1.bf16.msra.mxu0 0
        %485 = vmatprep.subr.bf16.mxu0 0
        %486 = vmatpush1.bf16.msra.mxu0 0
        %487 = vmatprep.subr.bf16.mxu0 0
        %488 = vmatpush1.bf16.msra.mxu0 0
        %489 = vmatprep.subr.bf16.mxu0 0
        %490 = vmatpush1.bf16.msra.mxu0 0
        %491 = vmatprep.subr.bf16.mxu0 %v308
        %492 = vmatpush1.bf16.msra.mxu0 %v307
        %493 = vmatprep.subr.bf16.mxu0 %v304
        %494 = vmatpush1.bf16.msra.mxu0 %v303
        %495 = vmatprep.subr.bf16.mxu0 0
        %496 = vmatpush2.bf16.msra.mxu0 0
        %497 = vmatprep.subr.bf16.mxu0 0
        %498 = vmatpush2.bf16.msra.mxu0 0
        %499 = vmatprep.subr.bf16.mxu0 0
        %500 = vmatpush2.bf16.msra.mxu0 0
        %501 = vmatprep.subr.bf16.mxu0 0
        %502 = vmatpush2.bf16.msra.mxu0 0
        %503 = vmatprep.subr.bf16.mxu0 0
        %504 = vmatpush2.bf16.msra.mxu0 0
        %505 = vmatprep.subr.bf16.mxu0 0
        %506 = vmatpush2.bf16.msra.mxu0 0
        %507 = vmatprep.subr.bf16.mxu0 0
        %508 = vmatpush2.bf16.msra.mxu0 0
        %509 = vmatprep.subr.bf16.mxu0 0
        %510 = vmatpush2.bf16.msra.mxu0 0
        %511 = vmatprep.mubr.bf16.mxu0 0
        %512 = vmatmul.mubr.bf16.gmra.mxu0 %v436
        %v513 = vpop.f32.mrf.mxu0
        %v514 = vadd.f32 %v425, %v513
        %v515 = vpop.f32.mrf.mxu0
        %v516 = vadd.f32 %v429, %v515
        %v517 = vpop.f32.mrf.mxu0
        %v518 = vpop.f32.mrf.mxu0
        %519 = vdwg.mxu0
        %v520 = vadd.f32 %v473, %v475
        %v521 = vadd.f32 %v520, %v514
        %v522 = vadd.f32 %v521, %v516
        %523 = vadd.xlane.f32.xlu0 %v522
        %v524 = vpop.xlane.xlu0 %523
        %v525 = vrcp.pop 512.0
        %v526 = vmul.f32 %v524, %v525
        %v527 = vsub.f32 %v473, %v526
        %v528 = vsub.f32 %v475, %v526
        %v529 = vsub.f32 %v514, %v526
        %v530 = vsub.f32 %v516, %v526
        %v531 = vmul.f32 %v527, %v527
        %v532 = vmul.f32 %v528, %v528
        %v533 = vmul.f32 %v529, %v529
        %v534 = vmul.f32 %v530, %v530
        %v535 = vadd.f32 %v531, %v532
        %v536 = vadd.f32 %v535, %v533
        %v537 = vadd.f32 %v536, %v534
        %538 = vadd.xlane.f32.xlu0 %v537
        %v539 = vpop.xlane.xlu0 %538
        %v540 = vmul.f32 %v539, %v525
        %v541 = vadd.f32 %v540, 1e-05
        %v542 = vrsqrt.pop %v541
        %v543 = vmul.f32 %v527, %v542
        %v544 = vmul.f32 %v528, %v542
        %v545 = vmul.f32 %v529, %v542
        %v546 = vmul.f32 %v530, %v542
        %v548 = vlaneseq
        %v549 = vshrl.u32 %v548, 7
        %v550 = vsub.s32 0, %v549
        %v551 = vrot.slane %v407, %v550
        %v552 = vlaneseq
        %v553 = vshrl.u32 %v552, 7
        %v554 = vsub.s32 1, %v553
        %v555 = vrot.slane %v407, %v554
        %v556 = vlaneseq
        %v557 = vshrl.u32 %v556, 7
        %v558 = vsub.s32 2, %v557
        %v559 = vrot.slane %v407, %v558
        %v560 = vlaneseq
        %v561 = vshrl.u32 %v560, 7
        %v562 = vsub.s32 3, %v561
        %v563 = vrot.slane %v407, %v562
        %v568 = vmul.f32 %v543, %v551
        %v569 = vmul.f32 %v544, %v555
        %v570 = vmul.f32 %v545, %v559
        %v571 = vmul.f32 %v546, %v563
        %v573 = vlaneseq
        %v574 = vshrl.u32 %v573, 7
        %v575 = vsub.s32 0, %v574
        %v576 = vrot.slane %v409, %v575
        %v577 = vlaneseq
        %v578 = vshrl.u32 %v577, 7
        %v579 = vsub.s32 1, %v578
        %v580 = vrot.slane %v409, %v579
        %v581 = vlaneseq
        %v582 = vshrl.u32 %v581, 7
        %v583 = vsub.s32 2, %v582
        %v584 = vrot.slane %v409, %v583
        %v585 = vlaneseq
        %v586 = vshrl.u32 %v585, 7
        %v587 = vsub.s32 3, %v586
        %v588 = vrot.slane %v409, %v587
        %v593 = vadd.f32 %v568, %v576
        %v594 = vadd.f32 %v569, %v580
        %v595 = vadd.f32 %v570, %v584
        %v596 = vadd.f32 %v571, %v588
        %v597 = vmul.f32 %v593, 0.5
        %v598 = vmul.f32 %v594, 0.5
        %v599 = vmul.f32 %v595, 0.5
        %v600 = vmul.f32 %v596, 0.5
        %v601 = vmul.f32 %v593, 0.70710677
        %v602 = vmul.f32 %v594, 0.70710677
        %v603 = vmul.f32 %v595, 0.70710677
        %v604 = vmul.f32 %v596, 0.70710677
        %v605 = verf.f32.pop %v601
        %v606 = verf.f32.pop %v602
        %v607 = verf.f32.pop %v603
        %v608 = verf.f32.pop %v604
        %v609 = vadd.f32 %v605, 1.0
        %v610 = vadd.f32 %v606, 1.0
        %v611 = vadd.f32 %v607, 1.0
        %v612 = vadd.f32 %v608, 1.0
        %v613 = vmul.f32 %v597, %v609
        %v614 = vmul.f32 %v598, %v610
        %v615 = vmul.f32 %v599, %v611
        %v616 = vmul.f32 %v600, %v612
        %v617 = vpack.c.bf16 %v613, %v613
        %v618 = vpack.c.bf16 %v614, %v614
        %v619 = vpack.c.bf16 %v615, %v615
        %v620 = vpack.c.bf16 %v616, %v616
        %v621 = vlaneseq
        %v622 = vshrl.u32 %v621, 7
        %v623 = vsub.s32 0, %v622
        %v624 = vrot.slane %v410, %v623
        %625 = vmatprep.subr.bf16.mxu0 0
        %626 = vmatpush1.bf16.msra.mxu0 %v380
        %627 = vmatprep.subr.bf16.mxu0 0
        %628 = vmatpush1.bf16.msra.mxu0 %v379
        %629 = vmatprep.subr.bf16.mxu0 0
        %630 = vmatpush1.bf16.msra.mxu0 %v378
        %631 = vmatprep.subr.bf16.mxu0 0
        %632 = vmatpush1.bf16.msra.mxu0 %v377
        %633 = vmatprep.subr.bf16.mxu0 0
        %634 = vmatpush1.bf16.msra.mxu0 %v376
        %635 = vmatprep.subr.bf16.mxu0 0
        %636 = vmatpush1.bf16.msra.mxu0 %v375
        %637 = vmatprep.subr.bf16.mxu0 0
        %638 = vmatpush1.bf16.msra.mxu0 %v374
        %639 = vmatprep.subr.bf16.mxu0 0
        %640 = vmatpush1.bf16.msra.mxu0 %v373
        %641 = vmatprep.subr.bf16.mxu0 0
        %642 = vmatpush2.bf16.msra.mxu0 %v388
        %643 = vmatprep.subr.bf16.mxu0 0
        %644 = vmatpush2.bf16.msra.mxu0 %v387
        %645 = vmatprep.subr.bf16.mxu0 0
        %646 = vmatpush2.bf16.msra.mxu0 %v386
        %647 = vmatprep.subr.bf16.mxu0 0
        %648 = vmatpush2.bf16.msra.mxu0 %v385
        %649 = vmatprep.subr.bf16.mxu0 0
        %650 = vmatpush2.bf16.msra.mxu0 %v384
        %651 = vmatprep.subr.bf16.mxu0 0
        %652 = vmatpush2.bf16.msra.mxu0 %v383
        %653 = vmatprep.subr.bf16.mxu0 0
        %654 = vmatpush2.bf16.msra.mxu0 %v382
        %655 = vmatprep.subr.bf16.mxu0 0
        %656 = vmatpush2.bf16.msra.mxu0 %v381
        %657 = vmatprep.mubr.bf16.mxu0 %v618
        %658 = vmatmul.mubr.bf16.gmra.mxu0 %v617
        %v659 = vpop.f32.mrf.mxu0
        %v660 = vadd.f32 %v624, %v659
        %v661 = vpop.f32.mrf.mxu0
        %v662 = vpop.f32.mrf.mxu0
        %v663 = vpop.f32.mrf.mxu0
        %664 = vdwg.mxu0
        %665 = vmatprep.subr.bf16.mxu0 0
        %666 = vmatpush1.bf16.msra.mxu0 %v396
        %667 = vmatprep.subr.bf16.mxu0 0
        %668 = vmatpush1.bf16.msra.mxu0 %v395
        %669 = vmatprep.subr.bf16.mxu0 0
        %670 = vmatpush1.bf16.msra.mxu0 %v394
        %671 = vmatprep.subr.bf16.mxu0 0
        %672 = vmatpush1.bf16.msra.mxu0 %v393
        %673 = vmatprep.subr.bf16.mxu0 0
        %674 = vmatpush1.bf16.msra.mxu0 %v392
        %675 = vmatprep.subr.bf16.mxu0 0
        %676 = vmatpush1.bf16.msra.mxu0 %v391
        %677 = vmatprep.subr.bf16.mxu0 0
        %678 = vmatpush1.bf16.msra.mxu0 %v390
        %679 = vmatprep.subr.bf16.mxu0 0
        %680 = vmatpush1.bf16.msra.mxu0 %v389
        %681 = vmatprep.subr.bf16.mxu0 0
        %682 = vmatpush2.bf16.msra.mxu0 %v404
        %683 = vmatprep.subr.bf16.mxu0 0
        %684 = vmatpush2.bf16.msra.mxu0 %v403
        %685 = vmatprep.subr.bf16.mxu0 0
        %686 = vmatpush2.bf16.msra.mxu0 %v402
        %687 = vmatprep.subr.bf16.mxu0 0
        %688 = vmatpush2.bf16.msra.mxu0 %v401
        %689 = vmatprep.subr.bf16.mxu0 0
        %690 = vmatpush2.bf16.msra.mxu0 %v400
        %691 = vmatprep.subr.bf16.mxu0 0
        %692 = vmatpush2.bf16.msra.mxu0 %v399
        %693 = vmatprep.subr.bf16.mxu0 0
        %694 = vmatpush2.bf16.msra.mxu0 %v398
        %695 = vmatprep.subr.bf16.mxu0 0
        %696 = vmatpush2.bf16.msra.mxu0 %v397
        %697 = vmatprep.mubr.bf16.mxu0 %v620
        %698 = vmatmul.mubr.bf16.gmra.mxu0 %v619
        %v699 = vpop.f32.mrf.mxu0
        %v700 = vadd.f32 %v660, %v699
        %v701 = vpop.f32.mrf.mxu0
        %v702 = vpop.f32.mrf.mxu0
        %v703 = vpop.f32.mrf.mxu0
        %704 = vdwg.mxu0
        %705 = vadd.xlane.f32.xlu0 %v700
        %v706 = vpop.xlane.xlu0 %705
        %v707 = vrcp.pop 128.0
        %v708 = vmul.f32 %v706, %v707
        %v709 = vsub.f32 %v700, %v708
        %v710 = vmul.f32 %v709, %v709
        %711 = vadd.xlane.f32.xlu0 %v710
        %v712 = vpop.xlane.xlu0 %711
        %v713 = vmul.f32 %v712, %v707
        %v714 = vadd.f32 %v713, 1e-05
        %v715 = vrsqrt.pop %v714
        %v716 = vmul.f32 %v709, %v715
        %v717 = vlaneseq
        %v718 = vshrl.u32 %v717, 7
        %v719 = vsub.s32 0, %v718
        %v720 = vrot.slane %v411, %v719
        %v721 = vmul.f32 %v716, %v720
        %v722 = vlaneseq
        %v723 = vshrl.u32 %v722, 7
        %v724 = vsub.s32 0, %v723
        %v725 = vrot.slane %v412, %v724
        %v726 = vadd.f32 %v721, %v725
        %v727 = vmul.f32 %v726, %v726
        %728 = vadd.xlane.f32.xlu0 %v727
        %v729 = vpop.xlane.xlu0 %728
        %v730 = vmax.f32 %v729, 1e-16
        %v731 = vrsqrt.pop %v730
        %v732 = vmul.f32 %v726, %v731
        %733 = vst [vmem:[%s281] sm:$0xff] %v732
        %s734 = sand.u32 %s142, 1
        %s735 = scalar_lea.sflag [#allocation4], %s734
        %s736 = sand.u32 %s142, 1
        %s737 = smul.addr %s736, 8
        %s738 = scalar_lea.vmem [#allocation10], %s737
        // Predicated region
        $region57: #{tpu_custom_call.1} parent=39 // pred_check
          %p739 = pneg %p152
        $region58: #{tpu_custom_call.1} parent=39 // pred_check_branch
          %741 = sbr.rel (%p739) target = $region60
        $region59: #{tpu_custom_call.1} parent=39 // pred_region
          %s743 = ssub.s32 128, 128
          %744 = vsyncadd %s735, %s743
          %s745 = smul.addr %s24, 128
          %s746 = scalar_lea.hbm %s5, %s745
          %s748 = sshll.u32 %s738, 4
          %s749 = int_to_ptr.vmem [resolvable:$true] %s748
          %751 = dma.vmem_to_hbm [thread:$0]  %s749, 128, %s746, %s735
        $region60: #{tpu_custom_call.1} parent=39 // pred_fallthru
          _
      $region40: #{tpu_custom_call.1} parent=5 // pred_fallthru
        _
      %p752 = scmp.le.s32.totalorder 2, %s19
      // Predicated region
      $region61: #{tpu_custom_call.1} parent=5 // pred_check
        %p753 = pneg %p752
      $region62: #{tpu_custom_call.1} parent=5 // pred_check_branch
        %755 = sbr.rel (%p753) target = $region64
      $region63: #{tpu_custom_call.1} parent=5 // pred_region
        %s756 = ssub.s32 %s19, 2
        // Predicated region
        $region65: #{tpu_custom_call.1} parent=63 // pred_check
          %p757 = pneg %p158
        $region66: #{tpu_custom_call.1} parent=63 // pred_check_branch
          %759 = sbr.rel (%p757) target = $region68
        $region67: #{tpu_custom_call.1} parent=63 // pred_region
          %s760 = sand.u32 %s143, 1
          %s761 = scalar_lea.sflag [#allocation4], %s760
          %s762 = sand.u32 %s143, 1
          %s763 = smul.addr %s762, 8
          %s764 = scalar_lea.vmem [#allocation10], %s763
          %765 = dma.done %s761, 128
        $region68: #{tpu_custom_call.1} parent=63 // pred_fallthru
          _
      $region64: #{tpu_custom_call.1} parent=5 // pred_fallthru
        _
    $region6: #{tpu_custom_call.1} parent=1 // loop_footer
      %s23 = sadd.s32 1, %s19
    $region7: #{tpu_custom_call.1} parent=1 // loop_footer_branch
      %18 = sbr.rel target = $region3
    $region8: #{tpu_custom_call.1} parent=1 // loop_exit
      _
    %766 = vsyncpa [#allocation3], 1
    %s767 = scalar_lea.sflag [#allocation3], 1
    %768 = vsyncpa %s767, 1
    %769 = vsyncpa [#allocation6], 1
    %770 = vsyncpa [#allocation9], 1
    %771 = vsyncpa [#allocation4], 1
    %s772 = scalar_lea.sflag [#allocation4], 1
    %773 = vsyncpa %s772, 1

</llo_original>
